<compile_context>
chip_gen: v7x
topology: tpu7x:2x2x1
jax: 0.10.0
libtpu: 0.0.40
codegen_flags: <defaults>
</compile_context>

<pallas_src>
import jax
import jax.numpy as jnp
from jax.experimental import pallas as pl
from jax.experimental.pallas import tpu as pltpu

TIMEFRAMES = ("15m", "1h", "4h", "12h")
TF_WEIGHTS = (0.2, 0.3, 0.35, 0.15)
COMMISSION = 0.001            # used only by the (dead) potential_pnl branch
PROFIT_FOCUS_WEIGHT = 10.0
CLASS_WEIGHTS = (1.0, 1.0, 0.5)


def _loss_kernel(logits_ref, tgt_ref, pc_ref, out_ref):
    logits = logits_ref[...].astype(jnp.float32)             # (T, C, B)
    tgt = tgt_ref[...]                                        # (T, B) int32
    pc = pc_ref[...].astype(jnp.float32)                      # (T, B)

    # ---- unroll the C=3 class dimension into three (T, B) planes ----
    l0 = logits[:, 0, :]
    l1 = logits[:, 1, :]
    l2 = logits[:, 2, :]

    # ---- weighted cross entropy, reduction='none' (log-softmax, VPU only) ----
    m = jnp.maximum(jnp.maximum(l0, l1), l2)                  # (T, B)
    sum_exp = jnp.exp(l0 - m) + jnp.exp(l1 - m) + jnp.exp(l2 - m)
    lse = jnp.log(sum_exp)                                    # (T, B)

    # gather logit of the target class with a 2-deep select chain
    l_tgt = jnp.where(tgt == 0, l0, jnp.where(tgt == 1, l1, l2))
    logp_t = l_tgt - m - lse                                  # log_softmax at target
    w_t = jnp.where(tgt == 0, CLASS_WEIGHTS[0],
                    jnp.where(tgt == 1, CLASS_WEIGHTS[1], CLASS_WEIGHTS[2]))
    ce = -w_t * logp_t                                        # per-sample weighted CE

    # ---- argmax over classes via direct comparisons (first-occurrence ties) ----
    pred_is_0 = (l0 >= l1) & (l0 >= l2)
    pred_is_1 = jnp.logical_not(pred_is_0) & (l1 >= l2)
    pred_not_2 = pred_is_0 | pred_is_1

    # NOTE: `potential_pnl` is computed in the torch module but never
    # contributes to the returned loss, so it is intentionally omitted here.

    abs_pc = jnp.abs(pc)
    movement_weight = 1.0 + abs_pc * PROFIT_FOCUS_WEIGHT
    wrong_dir = (pred_is_0 & (tgt == 1)) | (pred_is_1 & (tgt == 0))
    direction_penalty = jnp.where(wrong_dir, abs_pc * 2.0, 0.0)
    false_positive_penalty = jnp.where(pred_not_2 & (tgt == 2), 0.5, 0.0)

    per_sample = ce * movement_weight + direction_penalty + false_positive_penalty

    # ---- fused reduction: row t scaled by tf_weight[t] / B, one global sum ----
    T, B = per_sample.shape
    inv_b = 1.0 / float(B)
    t_idx = jax.lax.broadcasted_iota(jnp.int32, (T, B), 0)
    scale = jnp.where(
        t_idx == 0, TF_WEIGHTS[0] * inv_b,
        jnp.where(t_idx == 1, TF_WEIGHTS[1] * inv_b,
                  jnp.where(t_idx == 2, TF_WEIGHTS[2] * inv_b,
                            TF_WEIGHTS[3] * inv_b)))
    out_ref[0, 0] = jnp.sum(per_sample * scale)


@jax.jit
def _loss_pallas(logits_tcb, targets, price_change):
    out = pl.pallas_call(
        _loss_kernel,
        out_shape=jax.ShapeDtypeStruct((1, 1), jnp.float32),
        in_specs=[
            pl.BlockSpec(memory_space=pltpu.MemorySpace.VMEM),  # logits (T, C, B)
            pl.BlockSpec(memory_space=pltpu.MemorySpace.VMEM),  # targets (T, B)
            pl.BlockSpec(memory_space=pltpu.MemorySpace.VMEM),  # price_change (T, B)
        ],
        out_specs=pl.BlockSpec(memory_space=pltpu.MemorySpace.SMEM),
    )(logits_tcb, targets, price_change)
    return out[0, 0]


def directional_trading_loss(predictions, targets, price_changes):
    """Mirrors DirectionalTradingLoss.forward(predictions, targets, price_changes)."""
    # Stack as (T, C, B): batch on the lane axis (lane-dense).
    logits = jnp.stack(
        [predictions[f"direction_{tf}"].astype(jnp.float32).T for tf in TIMEFRAMES])
    tgts = jnp.stack(
        [targets[f"direction_{tf}"] for tf in TIMEFRAMES]).astype(jnp.int32)
    pcs = []
    for tf in TIMEFRAMES:
        pc = price_changes[tf]
        if pc.ndim > 1:
            pc = pc.squeeze(-1)
        pcs.append(pc)
    pc = jnp.stack(pcs).astype(jnp.float32)
    return _loss_pallas(logits, tgts, pc)


def _reference_loss(predictions, targets, price_changes):
    """Pure-JAX reference matching the PyTorch semantics."""
    cw = jnp.asarray(CLASS_WEIGHTS, jnp.float32)
    total = 0.0
    for tf, tfw in zip(TIMEFRAMES, TF_WEIGHTS):
        key = f"direction_{tf}"
        logits = predictions[key].astype(jnp.float32)
        tgt = targets[key].astype(jnp.int32)
        pc = price_changes[tf]
        if pc.ndim > 1:
            pc = pc.squeeze(-1)
        pc = pc.astype(jnp.float32)

        logp = jax.nn.log_softmax(logits, axis=-1)
        ce = -cw[tgt] * jnp.take_along_axis(logp, tgt[:, None], axis=-1)[:, 0]
        pred = jnp.argmax(logits, axis=-1)
        movement_weight = 1.0 + jnp.abs(pc) * PROFIT_FOCUS_WEIGHT
        wrong = ((pred == 0) & (tgt == 1)) | ((pred == 1) & (tgt == 0))
        dir_pen = wrong.astype(jnp.float32) * jnp.abs(pc) * 2.0
        fp_pen = ((pred != 2) & (tgt == 2)).astype(jnp.float32) * 0.5
        total += jnp.mean(ce * movement_weight + dir_pen + fp_pen) * tfw
    return total


if __name__ == "__main__":
    key = jax.random.PRNGKey(0)
    B = 8  # batch size
    predictions, tgts, pcs = {}, {}, {}
    for tf in TIMEFRAMES:
        key, k1, k2, k3 = jax.random.split(key, 4)
        predictions[f"direction_{tf}"] = jax.random.normal(k1, (B, 3), jnp.float32)
        tgts[f"direction_{tf}"] = jax.random.randint(k2, (B,), 0, 3, jnp.int32)
        pcs[tf] = jax.random.normal(k3, (B, 1), jnp.float32) * 0.02  # (B,1) -> squeezed inside

    loss = directional_trading_loss(predictions, tgts, pcs)
    jax.block_until_ready(loss)

    ref = _reference_loss(predictions, tgts, pcs)
    assert jnp.allclose(loss, ref, rtol=1e-5, atol=1e-6), (loss, ref)
    print("KERNEL_OK")
</pallas_src>

<mosaic_0001>
module attributes {stable_mosaic.version = 11 : i64} {
  func.func @_loss_kernel(%arg0: memref<4x3x8xf32, #tpu.memory_space<vmem>>, %arg1: memref<4x8xi32, #tpu.memory_space<vmem>>, %arg2: memref<4x8xf32, #tpu.memory_space<vmem>>, %arg3: memref<1x1xf32, #tpu.memory_space<smem>>) attributes {dimension_semantics = [], scalar_prefetch = 0 : i64, scratch_operands = 0 : i64, tpu.core_type = #tpu.core_type<tc>} {
    %c0 = arith.constant 0 : index
    %c0_0 = arith.constant 0 : index
    %c0_1 = arith.constant 0 : index
    %0 = vector.load %arg0[%c0, %c0_0, %c0_1] : memref<4x3x8xf32, #tpu.memory_space<vmem>>, vector<4x3x8xf32>
    %c0_2 = arith.constant 0 : index
    %c0_3 = arith.constant 0 : index
    %1 = vector.load %arg1[%c0_2, %c0_3] : memref<4x8xi32, #tpu.memory_space<vmem>>, vector<4x8xi32>
    %c0_4 = arith.constant 0 : index
    %c0_5 = arith.constant 0 : index
    %2 = vector.load %arg2[%c0_4, %c0_5] : memref<4x8xf32, #tpu.memory_space<vmem>>, vector<4x8xf32>
    %3 = vector.extract_strided_slice %0 {offsets = [0, 0, 0], sizes = [4, 1, 8], strides = [1, 1, 1]} : vector<4x3x8xf32> to vector<4x1x8xf32>
    %4 = vector.shape_cast %3 : vector<4x1x8xf32> to vector<4x8xf32>
    %5 = vector.extract_strided_slice %0 {offsets = [0, 1, 0], sizes = [4, 1, 8], strides = [1, 1, 1]} : vector<4x3x8xf32> to vector<4x1x8xf32>
    %6 = vector.shape_cast %5 : vector<4x1x8xf32> to vector<4x8xf32>
    %7 = vector.extract_strided_slice %0 {offsets = [0, 2, 0], sizes = [4, 1, 8], strides = [1, 1, 1]} : vector<4x3x8xf32> to vector<4x1x8xf32>
    %8 = vector.shape_cast %7 : vector<4x1x8xf32> to vector<4x8xf32>
    %9 = arith.maximumf %4, %6 : vector<4x8xf32>
    %10 = arith.maximumf %9, %8 : vector<4x8xf32>
    %11 = arith.subf %4, %10 : vector<4x8xf32>
    %12 = math.exp %11 : vector<4x8xf32>
    %13 = arith.subf %6, %10 : vector<4x8xf32>
    %14 = math.exp %13 : vector<4x8xf32>
    %15 = arith.addf %12, %14 : vector<4x8xf32>
    %16 = arith.subf %8, %10 : vector<4x8xf32>
    %17 = math.exp %16 : vector<4x8xf32>
    %18 = arith.addf %15, %17 : vector<4x8xf32>
    %19 = math.log %18 : vector<4x8xf32>
    %c0_i32 = arith.constant 0 : i32
    %20 = vector.broadcast %c0_i32 : i32 to vector<4x8xi32>
    %21 = arith.cmpi eq, %1, %20 : vector<4x8xi32>
    %c1_i32 = arith.constant 1 : i32
    %22 = vector.broadcast %c1_i32 : i32 to vector<4x8xi32>
    %23 = arith.cmpi eq, %1, %22 : vector<4x8xi32>
    %24 = arith.select %23, %6, %8 : vector<4x8xi1>, vector<4x8xf32>
    %25 = arith.select %21, %4, %24 : vector<4x8xi1>, vector<4x8xf32>
    %26 = arith.subf %25, %10 : vector<4x8xf32>
    %27 = arith.subf %26, %19 : vector<4x8xf32>
    %c0_i32_6 = arith.constant 0 : i32
    %28 = vector.broadcast %c0_i32_6 : i32 to vector<4x8xi32>
    %29 = arith.cmpi eq, %1, %28 : vector<4x8xi32>
    %c1_i32_7 = arith.constant 1 : i32
    %30 = vector.broadcast %c1_i32_7 : i32 to vector<4x8xi32>
    %31 = arith.cmpi eq, %1, %30 : vector<4x8xi32>
    %cst = arith.constant 1.000000e+00 : f32
    %cst_8 = arith.constant 5.000000e-01 : f32
    %32 = vector.broadcast %cst : f32 to vector<4x8xf32>
    %33 = vector.broadcast %cst_8 : f32 to vector<4x8xf32>
    %34 = arith.select %31, %32, %33 : vector<4x8xi1>, vector<4x8xf32>
    %cst_9 = arith.constant 1.000000e+00 : f32
    %35 = vector.broadcast %cst_9 : f32 to vector<4x8xf32>
    %36 = arith.select %29, %35, %34 : vector<4x8xi1>, vector<4x8xf32>
    %cst_10 = arith.constant 0.000000e+00 : f32
    %37 = vector.broadcast %cst_10 : f32 to vector<4x8xf32>
    %38 = arith.subf %37, %36 : vector<4x8xf32>
    %39 = arith.mulf %38, %27 : vector<4x8xf32>
    %40 = arith.cmpf oge, %4, %6 : vector<4x8xf32>
    %41 = arith.cmpf oge, %4, %8 : vector<4x8xf32>
    %42 = arith.andi %40, %41 : vector<4x8xi1>
    %cst_11 = arith.constant dense<true> : vector<4x8xi1>
    %43 = arith.xori %42, %cst_11 : vector<4x8xi1>
    %44 = arith.cmpf oge, %6, %8 : vector<4x8xf32>
    %45 = arith.andi %43, %44 : vector<4x8xi1>
    %46 = arith.ori %42, %45 : vector<4x8xi1>
    %47 = math.absf %2 : vector<4x8xf32>
    %cst_12 = arith.constant 1.000000e+01 : f32
    %48 = vector.broadcast %cst_12 : f32 to vector<4x8xf32>
    %49 = arith.mulf %47, %48 : vector<4x8xf32>
    %cst_13 = arith.constant 1.000000e+00 : f32
    %50 = vector.broadcast %cst_13 : f32 to vector<4x8xf32>
    %51 = arith.addf %50, %49 : vector<4x8xf32>
    %c1_i32_14 = arith.constant 1 : i32
    %52 = vector.broadcast %c1_i32_14 : i32 to vector<4x8xi32>
    %53 = arith.cmpi eq, %1, %52 : vector<4x8xi32>
    %54 = arith.andi %42, %53 : vector<4x8xi1>
    %c0_i32_15 = arith.constant 0 : i32
    %55 = vector.broadcast %c0_i32_15 : i32 to vector<4x8xi32>
    %56 = arith.cmpi eq, %1, %55 : vector<4x8xi32>
    %57 = arith.andi %45, %56 : vector<4x8xi1>
    %58 = arith.ori %54, %57 : vector<4x8xi1>
    %cst_16 = arith.constant 2.000000e+00 : f32
    %59 = vector.broadcast %cst_16 : f32 to vector<4x8xf32>
    %60 = arith.mulf %47, %59 : vector<4x8xf32>
    %cst_17 = arith.constant 0.000000e+00 : f32
    %61 = vector.broadcast %cst_17 : f32 to vector<4x8xf32>
    %62 = arith.select %58, %60, %61 : vector<4x8xi1>, vector<4x8xf32>
    %c2_i32 = arith.constant 2 : i32
    %63 = vector.broadcast %c2_i32 : i32 to vector<4x8xi32>
    %64 = arith.cmpi eq, %1, %63 : vector<4x8xi32>
    %65 = arith.andi %46, %64 : vector<4x8xi1>
    %cst_18 = arith.constant 5.000000e-01 : f32
    %cst_19 = arith.constant 0.000000e+00 : f32
    %66 = vector.broadcast %cst_18 : f32 to vector<4x8xf32>
    %67 = vector.broadcast %cst_19 : f32 to vector<4x8xf32>
    %68 = arith.select %65, %66, %67 : vector<4x8xi1>, vector<4x8xf32>
    %69 = arith.mulf %39, %51 : vector<4x8xf32>
    %70 = arith.addf %69, %62 : vector<4x8xf32>
    %71 = arith.addf %70, %68 : vector<4x8xf32>
    %72 = tpu.iota {dimensions = array<i32: 0>} : vector<4x8xi32>
    %c0_i32_20 = arith.constant 0 : i32
    %73 = vector.broadcast %c0_i32_20 : i32 to vector<4x8xi32>
    %74 = arith.cmpi eq, %72, %73 : vector<4x8xi32>
    %c1_i32_21 = arith.constant 1 : i32
    %75 = vector.broadcast %c1_i32_21 : i32 to vector<4x8xi32>
    %76 = arith.cmpi eq, %72, %75 : vector<4x8xi32>
    %c2_i32_22 = arith.constant 2 : i32
    %77 = vector.broadcast %c2_i32_22 : i32 to vector<4x8xi32>
    %78 = arith.cmpi eq, %72, %77 : vector<4x8xi32>
    %cst_23 = arith.constant 4.375000e-02 : f32
    %cst_24 = arith.constant 1.875000e-02 : f32
    %79 = vector.broadcast %cst_23 : f32 to vector<4x8xf32>
    %80 = vector.broadcast %cst_24 : f32 to vector<4x8xf32>
    %81 = arith.select %78, %79, %80 : vector<4x8xi1>, vector<4x8xf32>
    %cst_25 = arith.constant 3.750000e-02 : f32
    %82 = vector.broadcast %cst_25 : f32 to vector<4x8xf32>
    %83 = arith.select %76, %82, %81 : vector<4x8xi1>, vector<4x8xf32>
    %cst_26 = arith.constant 2.500000e-02 : f32
    %84 = vector.broadcast %cst_26 : f32 to vector<4x8xf32>
    %85 = arith.select %74, %84, %83 : vector<4x8xi1>, vector<4x8xf32>
    %86 = arith.mulf %71, %85 : vector<4x8xf32>
    %87 = vector.shape_cast %86 : vector<4x8xf32> to vector<1x4x8xf32>
    %cst_27 = arith.constant dense<0.000000e+00> : vector<1xf32>
    %88 = vector.multi_reduction <add>, %87, %cst_27 [1, 2] : vector<1x4x8xf32> to vector<1xf32>
    %89 = vector.shape_cast %88 : vector<1xf32> to vector<1x1x1xf32>
    %90 = vector.extract %89[0, 0, 0] : f32 from vector<1x1x1xf32>
    %c0_28 = arith.constant 0 : index
    %c0_29 = arith.constant 0 : index
    %91 = memref.load %arg3[%c0_28, %c0_29] : memref<1x1xf32, #tpu.memory_space<smem>>
    memref.store %90, %arg3[%c0_28, %c0_29] : memref<1x1xf32, #tpu.memory_space<smem>>
    return
  }
}

</mosaic_0001>

<llo_original>
// kernel: _loss_pallas.1
$region0: #{_loss_pallas.1}
  #allocation0 [shape = 'u32[]', space=smem, size = 0x4, offset = 0x4, fixed_abs, tag = 'smem constant byte address 0x4 - core index']
  #allocation1 [shape = 'u32[144,128]{1,0:T(1,128)}', space=vmem, size = 0x12000, scoped, tag = 'internal scratch']
  %s0 = inlined_call_operand.vmem [shape: f32[4,3,8], index: 0, kind: input, shape index: {}]
  %s1 = inlined_call_operand.vmem [shape: s32[4,8], index: 1, kind: input, shape index: {}]
  %s2 = inlined_call_operand.vmem [shape: f32[4,8], index: 2, kind: input, shape index: {}]
  %s3 = inlined_call_operand.hbm [shape: f32[1,1], index: 3, kind: output, shape index: {}]
  %s4 = sld [smem:[#allocation0]]
  $region22: #{_loss_pallas.1} parent=0
    _
  %s6 = ssub.s32 1, %s4
  %s7 = scalar_select 0, %s6, %s4
  $region1: #{_loss_pallas.1} parent=0
    #allocation2 [shape = 'u8[512]{0}', space=smem, size = 0x200, scoped, tag = 'output window, operand 0, single buffered']
    #allocation3 [shape = 's32[1]{0}', space=sflag, size = 0x4, scoped, tag = 'scoped memory for _loss_pallas.1']
    %8 = vsyncpa [#allocation3], 0
    // Predicated region
    $region2: #{_loss_pallas.1} parent=1 // pred_check
      _
    $region3: #{_loss_pallas.1} parent=1 // pred_check_branch
      %10 = sbr.rel (0) target = $region5
    $region4: #{_loss_pallas.1} parent=1 // pred_region
      _
    $region5: #{_loss_pallas.1} parent=1 // pred_fallthru
      _
    // Predicated region
    $region6: #{_loss_pallas.1} parent=1 // pred_check
      _
    $region7: #{_loss_pallas.1} parent=1 // pred_check_branch
      %12 = sbr.rel (0) target = $region9
    $region8: #{_loss_pallas.1} parent=1 // pred_region
      _
    $region9: #{_loss_pallas.1} parent=1 // pred_fallthru
      _
    // Predicated region
    $region10: #{_loss_pallas.1} parent=1 // pred_check
      _
    $region11: #{_loss_pallas.1} parent=1 // pred_check_branch
      %14 = sbr.rel (0) target = $region13
    $region12: #{_loss_pallas.1} parent=1 // pred_region
      _
    $region13: #{_loss_pallas.1} parent=1 // pred_fallthru
      _
    %v15 = vld [vmem:[%s0] sm:$0x7]
    %v16 = vld [vmem:[%s0 + $0x4] sm:$0x7]
    %v17 = vld [vmem:[%s0 + $0x8] sm:$0x7]
    %v18 = vld [vmem:[%s0 + $0xc] sm:$0x7]
    %v19 = vld [vmem:[%s1] sm:$0xf]
    %v20 = vld [vmem:[%s2] sm:$0xf]
    %v25 = vrot.slane %v15, 1
    %v26 = vrot.slane %v16, 1
    %v27 = vrot.slane %v17, 1
    %v28 = vrot.slane %v18, 1
    %v33 = vmax.f32 %v15, %v25
    %v34 = vmax.f32 %v16, %v26
    %v35 = vmax.f32 %v17, %v27
    %v36 = vmax.f32 %v18, %v28
    %v37 = vrot.slane %v15, 2
    %v38 = vrot.slane %v16, 2
    %v39 = vrot.slane %v17, 2
    %v40 = vrot.slane %v18, 2
    %v45 = vmax.f32 %v33, %v37
    %v46 = vmax.f32 %v34, %v38
    %v47 = vmax.f32 %v35, %v39
    %v48 = vmax.f32 %v36, %v40
    %v49 = vsub.f32 %v15, %v45
    %v50 = vsub.f32 %v16, %v46
    %v51 = vsub.f32 %v17, %v47
    %v52 = vsub.f32 %v18, %v48
    %v53 = vmul.f32 %v49, 1.442695
    %v54 = vpow.pop %v53
    %v55 = vmul.f32 %v50, 1.442695
    %v56 = vpow.pop %v55
    %v57 = vmul.f32 %v51, 1.442695
    %v58 = vpow.pop %v57
    %v59 = vmul.f32 %v52, 1.442695
    %v60 = vpow.pop %v59
    %v65 = vrot.slane %v45, 7
    %v66 = vrot.slane %v46, 7
    %v67 = vrot.slane %v47, 7
    %v68 = vrot.slane %v48, 7
    %v73 = vsub.f32 %v15, %v65
    %v74 = vsub.f32 %v16, %v66
    %v75 = vsub.f32 %v17, %v67
    %v76 = vsub.f32 %v18, %v68
    %v77 = vmul.f32 %v73, 1.442695
    %v78 = vpow.pop %v77
    %v79 = vmul.f32 %v74, 1.442695
    %v80 = vpow.pop %v79
    %v81 = vmul.f32 %v75, 1.442695
    %v82 = vpow.pop %v81
    %v83 = vmul.f32 %v76, 1.442695
    %v84 = vpow.pop %v83
    %v89 = vrot.slane %v78, 1
    %v90 = vrot.slane %v80, 1
    %v91 = vrot.slane %v82, 1
    %v92 = vrot.slane %v84, 1
    %v97 = vadd.f32 %v54, %v89
    %v98 = vadd.f32 %v56, %v90
    %v99 = vadd.f32 %v58, %v91
    %v100 = vadd.f32 %v60, %v92
    %v101 = vrot.slane %v45, 6
    %v102 = vrot.slane %v46, 6
    %v103 = vrot.slane %v47, 6
    %v104 = vrot.slane %v48, 6
    %v109 = vsub.f32 %v15, %v101
    %v110 = vsub.f32 %v16, %v102
    %v111 = vsub.f32 %v17, %v103
    %v112 = vsub.f32 %v18, %v104
    %v113 = vmul.f32 %v109, 1.442695
    %v114 = vpow.pop %v113
    %v115 = vmul.f32 %v110, 1.442695
    %v116 = vpow.pop %v115
    %v117 = vmul.f32 %v111, 1.442695
    %v118 = vpow.pop %v117
    %v119 = vmul.f32 %v112, 1.442695
    %v120 = vpow.pop %v119
    %v125 = vrot.slane %v114, 2
    %v126 = vrot.slane %v116, 2
    %v127 = vrot.slane %v118, 2
    %v128 = vrot.slane %v120, 2
    %v133 = vadd.f32 %v97, %v125
    %v134 = vadd.f32 %v98, %v126
    %v135 = vadd.f32 %v99, %v127
    %v136 = vadd.f32 %v100, %v128
    %v137 = vlog2.pop %v133
    %v138 = vmul.f32 %v137, 0.6931472
    %v139 = vlog2.pop %v134
    %v140 = vmul.f32 %v139, 0.6931472
    %v141 = vlog2.pop %v135
    %v142 = vmul.f32 %v141, 0.6931472
    %v143 = vlog2.pop %v136
    %v144 = vmul.f32 %v143, 0.6931472
    %vm145 = vcmp.eq.s32.totalorder %v19, 0
    %vm146 = vcmp.eq.s32.totalorder %v19, 1
    %vm147 = vcmask 1041409
    %v148 = vsel %vm147, %v16, %v25
    %v149 = vrot.slane %v17, 7
    %vm150 = vcmask 1042434
    %v151 = vsel %vm150, %v149, %v148
    %v152 = vrot.slane %v18, 6
    %vm153 = vcmask 1043459
    %v154 = vsel %vm153, %v152, %v151
    %v156 = vsel %vm147, %v26, %v37
    %v157 = vsel %vm150, %v17, %v156
    %v158 = vrot.slane %v18, 7
    %v159 = vsel %vm153, %v158, %v157
    %v161 = vsel %vm146, %v154, %v159
    %v162 = vrot.slane %v16, 7
    %v163 = vsel %vm147, %v162, %v15
    %v164 = vrot.slane %v17, 6
    %v165 = vsel %vm150, %v164, %v163
    %v166 = vrot.slane %v18, 5
    %v167 = vsel %vm153, %v166, %v165
    %v169 = vsel %vm145, %v167, %v161
    %v170 = vsel %vm147, %v66, %v45
    %v171 = vsel %vm150, %v103, %v170
    %v172 = vrot.slane %v48, 5
    %v173 = vsel %vm153, %v172, %v171
    %v175 = vsub.f32 %v169, %v173
    %v180 = vrot.slane %v140, 7
    %v181 = vsel %vm147, %v180, %v138
    %v182 = vrot.slane %v142, 6
    %v183 = vsel %vm150, %v182, %v181
    %v184 = vrot.slane %v144, 5
    %v185 = vsel %vm153, %v184, %v183
    %v187 = vsub.f32 %v175, %v185
    %v188 = vsel %vm146, 1.0, 0.5
    %v189 = vsel %vm145, 1.0, %v188
    %v190 = vsub.f32 0.0, %v189
    %v191 = vmul.f32 %v190, %v187
    %vm192 = vcmp.ge.f32.partialorder %v15, %v25
    %vm193 = vcmp.ge.f32.partialorder %v16, %v26
    %vm194 = vcmp.ge.f32.partialorder %v17, %v27
    %vm195 = vcmp.ge.f32.partialorder %v18, %v28
    %vm196 = vcmp.ge.f32.partialorder %v15, %v37
    %vm197 = vcmp.ge.f32.partialorder %v16, %v38
    %vm198 = vcmp.ge.f32.partialorder %v17, %v39
    %vm199 = vcmp.ge.f32.partialorder %v18, %v40
    %vm200 = vmand %vm192, %vm196
    %vm201 = vmand %vm193, %vm197
    %vm202 = vmand %vm194, %vm198
    %vm203 = vmand %vm195, %vm199
    %vm204 = vmxor %vm200, 1
    %vm205 = vmxor %vm201, 1
    %vm206 = vmxor %vm202, 1
    %vm207 = vmxor %vm203, 1
    %v208 = vsel %vm192, 1, 0
    %v209 = vsel %vm193, 1, 0
    %v210 = vsel %vm194, 1, 0
    %v211 = vsel %vm195, 1, 0
    %v212 = vrot.slane %v208, 1
    %v213 = vrot.slane %v209, 1
    %v214 = vrot.slane %v210, 1
    %v215 = vrot.slane %v211, 1
    %vm216 = vcmp.ne.s32.totalorder %v212, 0
    %vm217 = vcmp.ne.s32.totalorder %v213, 0
    %vm218 = vcmp.ne.s32.totalorder %v214, 0
    %vm219 = vcmp.ne.s32.totalorder %v215, 0
    %vm220 = vmand %vm204, %vm216
    %vm221 = vmand %vm205, %vm217
    %vm222 = vmand %vm206, %vm218
    %vm223 = vmand %vm207, %vm219
    %vm224 = vmor %vm200, %vm220
    %vm225 = vmor %vm201, %vm221
    %vm226 = vmor %vm202, %vm222
    %vm227 = vmor %vm203, %vm223
    %v228 = vand.u32 2147483647, %v20
    %v229 = vmul.f32 %v228, 10.0
    %v230 = vadd.f32 %v229, 1.0
    %v231 = vsel %vm146, 1, 0
    %v232 = vrot.slane %v231, 1
    %v233 = vrot.slane %v231, 2
    %v234 = vrot.slane %v231, 3
    %vm235 = vcmp.ne.s32.totalorder %v231, 0
    %vm236 = vcmp.ne.s32.totalorder %v232, 0
    %vm237 = vcmp.ne.s32.totalorder %v233, 0
    %vm238 = vcmp.ne.s32.totalorder %v234, 0
    %vm239 = vmand %vm200, %vm235
    %vm240 = vmand %vm201, %vm236
    %vm241 = vmand %vm202, %vm237
    %vm242 = vmand %vm203, %vm238
    %v243 = vsel %vm145, 1, 0
    %v244 = vrot.slane %v243, 1
    %v245 = vrot.slane %v243, 2
    %v246 = vrot.slane %v243, 3
    %vm247 = vcmp.ne.s32.totalorder %v243, 0
    %vm248 = vcmp.ne.s32.totalorder %v244, 0
    %vm249 = vcmp.ne.s32.totalorder %v245, 0
    %vm250 = vcmp.ne.s32.totalorder %v246, 0
    %vm251 = vmand %vm220, %vm247
    %vm252 = vmand %vm221, %vm248
    %vm253 = vmand %vm222, %vm249
    %vm254 = vmand %vm223, %vm250
    %vm255 = vmor %vm239, %vm251
    %vm256 = vmor %vm240, %vm252
    %vm257 = vmor %vm241, %vm253
    %vm258 = vmor %vm242, %vm254
    %v259 = vmul.f32 %v228, 2.0
    %v261 = vrot.slane %v259, 1
    %v262 = vrot.slane %v259, 2
    %v263 = vrot.slane %v259, 3
    %v268 = vsel %vm255, %v259, 0.0
    %v269 = vsel %vm256, %v261, 0.0
    %v270 = vsel %vm257, %v262, 0.0
    %v271 = vsel %vm258, %v263, 0.0
    %vm272 = vcmp.eq.s32.totalorder %v19, 2
    %v273 = vsel %vm272, 1, 0
    %v274 = vrot.slane %v273, 1
    %v275 = vrot.slane %v273, 2
    %v276 = vrot.slane %v273, 3
    %vm277 = vcmp.ne.s32.totalorder %v273, 0
    %vm278 = vcmp.ne.s32.totalorder %v274, 0
    %vm279 = vcmp.ne.s32.totalorder %v275, 0
    %vm280 = vcmp.ne.s32.totalorder %v276, 0
    %vm281 = vmand %vm224, %vm277
    %vm282 = vmand %vm225, %vm278
    %vm283 = vmand %vm226, %vm279
    %vm284 = vmand %vm227, %vm280
    %v285 = vsel %vm281, 0.5, 0.0
    %v286 = vsel %vm282, 0.5, 0.0
    %v287 = vsel %vm283, 0.5, 0.0
    %v288 = vsel %vm284, 0.5, 0.0
    %v289 = vmul.f32 %v191, %v230
    %v294 = vrot.slane %v269, 7
    %v295 = vsel %vm147, %v294, %v268
    %v296 = vrot.slane %v270, 6
    %v297 = vsel %vm150, %v296, %v295
    %v298 = vrot.slane %v271, 5
    %v299 = vsel %vm153, %v298, %v297
    %v301 = vadd.f32 %v289, %v299
    %v306 = vrot.slane %v286, 7
    %v307 = vsel %vm147, %v306, %v285
    %v308 = vrot.slane %v287, 6
    %v309 = vsel %vm150, %v308, %v307
    %v310 = vrot.slane %v288, 5
    %v311 = vsel %vm153, %v310, %v309
    %v313 = vadd.f32 %v301, %v311
    %v314 = vlaneseq
    %v315 = vshrl.u32 %v314, 7
    %vm316 = vcmp.eq.s32.totalorder %v315, 0
    %vm317 = vcmp.eq.s32.totalorder %v315, 1
    %vm318 = vcmp.eq.s32.totalorder %v315, 2
    %v319 = vsel %vm318, 0.04375, 0.01875
    %v320 = vsel %vm317, 0.0375, %v319
    %v321 = vsel %vm316, 0.025, %v320
    %v322 = vmul.f32 %v313, %v321
    %vm323 = vcmask 60416
    %v324 = vsel %vm323, %v322, 0.0
    %325 = vadd.xlane.f32.xlu0 %v324
    %v326 = vpop.xlane.xlu0 %325
    %v327 = vrot.slane %v326, 4
    %v328 = vadd.f32 %v326, %v327
    %v329 = vrot.slane %v328, 2
    %v330 = vadd.f32 %v328, %v329
    %v331 = vrot.slane %v330, 1
    %v332 = vadd.f32 %v330, %v331
    %s333 = vtos %v332
    %s334 = scalar_lea.smem [#allocation2], 0
    %335 = sst [smem:[%s334]] %s333
    // Predicated region
    $region14: #{_loss_pallas.1} parent=1 // pred_check
      _
    $region15: #{_loss_pallas.1} parent=1 // pred_check_branch
      %337 = sbr.rel (0) target = $region17
    $region16: #{_loss_pallas.1} parent=1 // pred_region
      %s339 = ssub.s32 16, 16
      %340 = vsyncadd [#allocation3], %s339
      %343 = dma.smem_to_hbm [#allocation2], 16, %s3, [#allocation3]
    $region17: #{_loss_pallas.1} parent=1 // pred_fallthru
      _
    // Predicated region
    $region18: #{_loss_pallas.1} parent=1 // pred_check
      _
    $region19: #{_loss_pallas.1} parent=1 // pred_check_branch
      %345 = sbr.rel (0) target = $region21
    $region20: #{_loss_pallas.1} parent=1 // pred_region
      %346 = dma.done [#allocation3], 16
    $region21: #{_loss_pallas.1} parent=1 // pred_fallthru
      _
    %347 = sfence
    %348 = vsyncpa [#allocation3], 1

</llo_original>
